<compile_context>
chip_gen: v6e
topology: v6e:2x2x1
jax: 0.10.0
libtpu: 0.0.40
codegen_flags: <defaults>
</compile_context>

<pallas_src>
import functools

import jax
import jax.numpy as jnp
import numpy as np
from jax import lax
from jax.experimental import pallas as pl
from jax.experimental.pallas import tpu as pltpu


# ----------------------------------------------------------------------------
# Shared conv tile: build K=27 slab once in VMEM scratch, single contraction
# ----------------------------------------------------------------------------
def _conv_tile(x_ref, w_ref, slab_ref, *, nb, c_out, W, HW):
    # W-boundary masks over output pixels q = h*W + w (built once per step).
    col = lax.broadcasted_iota(jnp.int32, (1, 1, HW), 2) % W
    mask_l = (col != 0).astype(jnp.float32)        # kills kw==0 taps at w==0
    mask_r = (col != (W - 1)).astype(jnp.float32)  # kills kw==2 taps at w==W-1

    # Write each shifted tap exactly once into the (nb, 27, HW) slab scratch,
    # applying the boundary masks only to the affected rows during the build.
    for kh in range(3):
        for kw in range(3):
            start = kh * W + kw                     # static lane offset
            v = x_ref[:, :, start:start + HW]       # (nb, 3, HW)
            if kw == 0:
                v = v * mask_l
            elif kw == 2:
                v = v * mask_r
            t = kh * 3 + kw
            slab_ref[:, t * 3:(t + 1) * 3, :] = v   # k = t*3 + ci

    # One K=27 contraction per image block (weight broadcast hoisted, done
    # once per grid step); accumulator written once, in f32.
    w_b = jnp.broadcast_to(w_ref[...][None], (nb, c_out, 27))
    acc = lax.dot_general(
        w_b, slab_ref[...],
        dimension_numbers=(((2,), (1,)), ((0,), (0,))),
        preferred_element_type=jnp.float32)         # (nb, c_out, HW)
    return acc


# ----------------------------------------------------------------------------
# Pass 1: BN batch statistics (sequential reduction over image blocks)
# ----------------------------------------------------------------------------
def _stats_kernel(x_ref, w_ref, g_ref, b_ref, scale_ref, shift_ref,
                  slab_ref, sum_ref, sq_ref, *, nb, c_out, W, HW, eps, m_total):
    step = pl.program_id(0)

    acc = _conv_tile(x_ref, w_ref, slab_ref, nb=nb, c_out=c_out, W=W, HW=HW)

    @pl.when(step == 0)
    def _init():
        sum_ref[...] = jnp.zeros_like(sum_ref)
        sq_ref[...] = jnp.zeros_like(sq_ref)

    sum_ref[...] += jnp.sum(jnp.sum(acc, axis=2, keepdims=True), axis=0)
    sq_ref[...] += jnp.sum(jnp.sum(acc * acc, axis=2, keepdims=True), axis=0)

    @pl.when(step == pl.num_programs(0) - 1)
    def _finalize():
        inv_m = 1.0 / float(m_total)
        mean = sum_ref[...] * inv_m                       # (c_out, 1)
        var = jnp.maximum(sq_ref[...] * inv_m - mean * mean, 0.0)  # biased var
        inv_std = lax.rsqrt(var + eps)
        scale = g_ref[...] * inv_std
        scale_ref[...] = scale
        shift_ref[...] = b_ref[...] - mean * scale


# ----------------------------------------------------------------------------
# Pass 2: recompute conv (K=27) + fused BN affine, lane-dense store
# ----------------------------------------------------------------------------
def _apply_kernel(x_ref, w_ref, scale_ref, shift_ref, o_ref, slab_ref,
                  *, nb, c_out, W, HW):
    acc = _conv_tile(x_ref, w_ref, slab_ref, nb=nb, c_out=c_out, W=W, HW=HW)
    o_ref[...] = (acc * scale_ref[...][None, :, :]
                  + shift_ref[...][None, :, :])


# ----------------------------------------------------------------------------
# Sizing helpers
# ----------------------------------------------------------------------------
def _round_up(v, m):
    return (v + m - 1) // m * m


def _vmem_limit_bytes():
    try:
        cap = int(pltpu.get_tpu_info().vmem_capacity_bytes)
    except Exception:
        cap = 64 << 20            # conservative default (v7x per-core VMEM)
    # leave headroom below physical / scoped ceiling
    return (min(cap, 128 << 20) * 3) // 4


def _choose_images_per_step(N, lx_pad, HW, c_out, budget_bytes):
    """Largest per-step image count that keeps the working set in budget."""
    # f32 per-image footprint: double-buffered x block + double-buffered out
    # block + K=27 slab scratch + conv accumulator / BN temporaries headroom.
    per_img = 4 * (2 * 3 * lx_pad + 2 * c_out * HW + 27 * HW + 2 * c_out * HW)
    cap = max(1, int(budget_bytes // max(per_img, 1)))
    cap = min(cap, 256)
    if cap >= N:
        return N, N
    best_div = 1
    for d in range(1, cap + 1):
        if N % d == 0:
            best_div = d
    if best_div >= max(1, cap // 2):
        return best_div, N
    # Awkward N: pad the batch with zero images.  The conv has no bias, so
    # padded images contribute exactly 0 to the BN sums; the divisor below
    # stays the REAL N*H*W, so the statistics are unchanged.
    nb = cap
    return nb, _round_up(N, nb)


# ----------------------------------------------------------------------------
# Wrapper
# ----------------------------------------------------------------------------
def stem_forward(x_nchw, conv_w_oihw, gamma, beta, eps=1e-5):
    """Conv2d(3->C, k=3, pad=1, no bias) + BatchNorm2d (batch stats), NCHW."""
    N, C_in, H, W = x_nchw.shape
    assert C_in == 3, "NAS201 stem has 3 input channels"
    C_out = conv_w_oihw.shape[0]
    HW = H * W            # NOTE: lane-dense output stores want HW % 128 == 0
    Lx = (H + 2) * W + 2                       # H-padded flat length + guards
    Lx_pad = _round_up(Lx, 128)                # lane-aligned x block width

    vmem_limit = _vmem_limit_bytes()
    nb, N_pad = _choose_images_per_step(N, Lx_pad, HW, C_out, vmem_limit // 2)
    steps = N_pad // nb

    # --- cheap XLA prep on the small 3-channel input (no 9x im2col) ----------
    xf = x_nchw.astype(jnp.float32)
    if N_pad != N:
        xf = jnp.pad(xf, ((0, N_pad - N), (0, 0), (0, 0), (0, 0)))
    x_hp = jnp.pad(xf, ((0, 0), (0, 0), (1, 1), (0, 0)))     # (N_pad,3,H+2,W)
    x_flat = x_hp.reshape(N_pad, 3, (H + 2) * W)
    x_in = jnp.pad(x_flat, ((0, 0), (0, 0), (1, 1 + Lx_pad - Lx)))  # guards+lane pad

    # weight[o, ci, kh, kw] -> (C_out, 27) with k = (kh*3 + kw)*3 + ci
    w_mat = jnp.transpose(conv_w_oihw.astype(jnp.float32),
                          (0, 2, 3, 1)).reshape(C_out, 9 * C_in)
    g2 = gamma.reshape(C_out, 1).astype(jnp.float32)
    b2 = beta.reshape(C_out, 1).astype(jnp.float32)

    # ---------------- pass 1: batch statistics -> scale / shift --------------
    stats_kernel = functools.partial(
        _stats_kernel, nb=nb, c_out=C_out, W=W, HW=HW,
        eps=float(eps), m_total=N * H * W)
    scale, shift = pl.pallas_call(
        stats_kernel,
        out_shape=(jax.ShapeDtypeStruct((C_out, 1), jnp.float32),
                   jax.ShapeDtypeStruct((C_out, 1), jnp.float32)),
        grid_spec=pltpu.PrefetchScalarGridSpec(
            num_scalar_prefetch=0,
            grid=(steps,),
            in_specs=[
                pl.BlockSpec((nb, 3, Lx_pad), lambda i: (i, 0, 0)),     # x
                pl.BlockSpec((C_out, 9 * C_in), lambda i: (0, 0)),      # w
                pl.BlockSpec((C_out, 1), lambda i: (0, 0)),             # gamma
                pl.BlockSpec((C_out, 1), lambda i: (0, 0)),             # beta
            ],
            out_specs=[pl.BlockSpec((C_out, 1), lambda i: (0, 0)),      # scale
                       pl.BlockSpec((C_out, 1), lambda i: (0, 0))],     # shift
            scratch_shapes=[pltpu.VMEM((nb, 27, HW), jnp.float32),      # slab
                            pltpu.VMEM((C_out, 1), jnp.float32),        # sum
                            pltpu.VMEM((C_out, 1), jnp.float32)]),      # sumsq
        compiler_params=pltpu.CompilerParams(
            dimension_semantics=("arbitrary",),
            vmem_limit_bytes=vmem_limit),
    )(x_in, w_mat, g2, b2)

    # ---------------- pass 2: conv + fused BN affine (parallel) --------------
    apply_kernel = functools.partial(
        _apply_kernel, nb=nb, c_out=C_out, W=W, HW=HW)
    out_flat = pl.pallas_call(
        apply_kernel,
        out_shape=jax.ShapeDtypeStruct((N_pad, C_out, HW), jnp.float32),
        grid_spec=pltpu.PrefetchScalarGridSpec(
            num_scalar_prefetch=0,
            grid=(steps,),
            in_specs=[
                pl.BlockSpec((nb, 3, Lx_pad), lambda i: (i, 0, 0)),     # x
                pl.BlockSpec((C_out, 9 * C_in), lambda i: (0, 0)),      # w
                pl.BlockSpec((C_out, 1), lambda i: (0, 0)),             # scale
                pl.BlockSpec((C_out, 1), lambda i: (0, 0)),             # shift
            ],
            out_specs=pl.BlockSpec((nb, C_out, HW), lambda i: (i, 0, 0)),
            scratch_shapes=[pltpu.VMEM((nb, 27, HW), jnp.float32)]),    # slab
        compiler_params=pltpu.CompilerParams(
            dimension_semantics=("parallel",),      # megacore-shardable on v7x
            vmem_limit_bytes=vmem_limit),
    )(x_in, w_mat, scale, shift)

    if N_pad != N:
        out_flat = out_flat[:N]
    # (N, C_out, H*W) -> (N, C_out, H, W): pure metadata reshape, no transpose.
    return out_flat.reshape(N, C_out, H, W)


# ----------------------------------------------------------------------------
# Pure-JAX reference (mirrors the PyTorch module semantics)
# ----------------------------------------------------------------------------
def stem_reference(x_nchw, conv_w_oihw, gamma, beta, eps=1e-5):
    y = lax.conv_general_dilated(
        x_nchw, conv_w_oihw,
        window_strides=(1, 1), padding=((1, 1), (1, 1)),
        dimension_numbers=("NCHW", "OIHW", "NCHW"))
    mean = jnp.mean(y, axis=(0, 2, 3), keepdims=True)
    var = jnp.mean((y - mean) ** 2, axis=(0, 2, 3), keepdims=True)
    y_hat = (y - mean) / jnp.sqrt(var + eps)
    return y_hat * gamma.reshape(1, -1, 1, 1) + beta.reshape(1, -1, 1, 1)


if __name__ == "__main__":
    key = jax.random.PRNGKey(0)
    k_x, k_w, k_g, k_b = jax.random.split(key, 4)

    N, C_in, H, W = 2, 3, 16, 16
    out_channels = 16   # NAS201Model default stem_ch

    x = jax.random.normal(k_x, (N, C_in, H, W), dtype=jnp.float32)
    conv_w = jax.random.normal(k_w, (out_channels, C_in, 3, 3),
                               dtype=jnp.float32) * 0.1
    gamma = 1.0 + 0.1 * jax.random.normal(k_g, (out_channels,), dtype=jnp.float32)
    beta = 0.1 * jax.random.normal(k_b, (out_channels,), dtype=jnp.float32)

    out = jax.block_until_ready(stem_forward(x, conv_w, gamma, beta))
    ref = jax.block_until_ready(stem_reference(x, conv_w, gamma, beta))
    np.testing.assert_allclose(np.asarray(out), np.asarray(ref),
                               rtol=1e-3, atol=1e-3)

    print("KERNEL_OK")
</pallas_src>

<mosaic_0001>
module attributes {stable_mosaic.version = 11 : i64} {
  func.func @_stats_kernel(%arg0: i32, %arg1: memref<2x3x384xf32, #tpu.memory_space<vmem>>, %arg2: memref<16x27xf32, #tpu.memory_space<vmem>>, %arg3: memref<16x1xf32, #tpu.memory_space<vmem>>, %arg4: memref<16x1xf32, #tpu.memory_space<vmem>>, %arg5: memref<16x1xf32, #tpu.memory_space<vmem>>, %arg6: memref<16x1xf32, #tpu.memory_space<vmem>>, %arg7: memref<2x27x256xf32, #tpu.memory_space<vmem>>, %arg8: memref<16x1xf32, #tpu.memory_space<vmem>>, %arg9: memref<16x1xf32, #tpu.memory_space<vmem>>) attributes {dimension_semantics = [#tpu.dimension_semantics<arbitrary>], iteration_bounds = array<i64: 1>, scalar_prefetch = 0 : i64, scratch_operands = 3 : i64, tpu.core_type = #tpu.core_type<tc>, window_params = [{transform_indices = @transform_0, window_bounds = array<i64: 2, 3, 384>}, {pipeline_mode = #tpu.pipeline_mode<synchronous>, transform_indices = @transform_1, window_bounds = array<i64: 16, 27>}, {pipeline_mode = #tpu.pipeline_mode<synchronous>, transform_indices = @transform_2, window_bounds = array<i64: 16, 1>}, {pipeline_mode = #tpu.pipeline_mode<synchronous>, transform_indices = @transform_3, window_bounds = array<i64: 16, 1>}, {pipeline_mode = #tpu.pipeline_mode<synchronous>, transform_indices = @transform_4, window_bounds = array<i64: 16, 1>}, {pipeline_mode = #tpu.pipeline_mode<synchronous>, transform_indices = @transform_5, window_bounds = array<i64: 16, 1>}]} {
    %0 = tpu.iota {dimensions = array<i32: 2>} : vector<1x1x256xi32>
    %c16_i32 = arith.constant 16 : i32
    %c0_i32 = arith.constant 0 : i32
    %1 = arith.cmpi eq, %c16_i32, %c0_i32 : i32
    %c1_i32 = arith.constant 1 : i32
    %2 = arith.select %1, %c1_i32, %c16_i32 : i32
    %3 = vector.broadcast %2 : i32 to vector<1x1x256xi32>
    %4 = arith.remsi %0, %3 : vector<1x1x256xi32>
    %c0_i32_0 = arith.constant 0 : i32
    %5 = vector.broadcast %c0_i32_0 : i32 to vector<1x1x256xi32>
    %6 = arith.cmpi ne, %4, %5 : vector<1x1x256xi32>
    %c0_i32_1 = arith.constant 0 : i32
    %7 = vector.broadcast %c0_i32_1 : i32 to vector<1x1x256xi32>
    %8 = arith.cmpi slt, %4, %7 : vector<1x1x256xi32>
    %c0_i32_2 = arith.constant 0 : i32
    %9 = arith.cmpi slt, %2, %c0_i32_2 : i32
    %10 = vector.broadcast %9 : i1 to vector<1x1x256xi1>
    %11 = vector.broadcast %10 : vector<1x1x256xi1> to vector<1x1x256xi1>
    %12 = arith.xori %8, %11 : vector<1x1x256xi1>
    %13 = arith.andi %12, %6 : vector<1x1x256xi1>
    %14 = vector.broadcast %2 : i32 to vector<1x1x256xi32>
    %15 = arith.addi %4, %14 : vector<1x1x256xi32>
    %16 = arith.select %13, %15, %4 : vector<1x1x256xi1>, vector<1x1x256xi32>
    %c0_i32_3 = arith.constant 0 : i32
    %17 = vector.broadcast %c0_i32_3 : i32 to vector<1x1x256xi32>
    %18 = arith.cmpi ne, %16, %17 : vector<1x1x256xi32>
    %19 = arith.extui %18 : vector<1x1x256xi1> to vector<1x1x256xi32>
    %20 = arith.sitofp %19 : vector<1x1x256xi32> to vector<1x1x256xf32>
    %c15_i32 = arith.constant 15 : i32
    %21 = vector.broadcast %c15_i32 : i32 to vector<1x1x256xi32>
    %22 = arith.cmpi ne, %16, %21 : vector<1x1x256xi32>
    %23 = arith.extui %22 : vector<1x1x256xi1> to vector<1x1x256xi32>
    %24 = arith.sitofp %23 : vector<1x1x256xi32> to vector<1x1x256xf32>
    %c0 = arith.constant 0 : index
    %c0_4 = arith.constant 0 : index
    %c0_5 = arith.constant 0 : index
    %25 = vector.load %arg1[%c0, %c0_4, %c0_5] : memref<2x3x384xf32, #tpu.memory_space<vmem>>, vector<2x3x256xf32>
    %26 = vector.broadcast %20 : vector<1x1x256xf32> to vector<2x3x256xf32>
    %27 = arith.mulf %25, %26 : vector<2x3x256xf32>
    %c0_6 = arith.constant 0 : index
    %c0_7 = arith.constant 0 : index
    %c0_8 = arith.constant 0 : index
    %28 = vector.load %arg7[%c0_6, %c0_7, %c0_8] : memref<2x27x256xf32, #tpu.memory_space<vmem>>, vector<2x3x256xf32>
    tpu.vector_store %arg7[%c0_6, %c0_7, %c0_8], %27 {strides = array<i32>} : memref<2x27x256xf32, #tpu.memory_space<vmem>>, vector<2x3x256xf32>,
    %c0_9 = arith.constant 0 : index
    %c0_10 = arith.constant 0 : index
    %c1 = arith.constant 1 : index
    %29 = vector.load %arg1[%c0_9, %c0_10, %c1] : memref<2x3x384xf32, #tpu.memory_space<vmem>>, vector<2x3x256xf32>
    %c0_11 = arith.constant 0 : index
    %c3 = arith.constant 3 : index
    %c0_12 = arith.constant 0 : index
    %30 = vector.load %arg7[%c0_11, %c3, %c0_12] : memref<2x27x256xf32, #tpu.memory_space<vmem>>, vector<2x3x256xf32>
    tpu.vector_store %arg7[%c0_11, %c3, %c0_12], %29 {strides = array<i32>} : memref<2x27x256xf32, #tpu.memory_space<vmem>>, vector<2x3x256xf32>,
    %c0_13 = arith.constant 0 : index
    %c0_14 = arith.constant 0 : index
    %c2 = arith.constant 2 : index
    %31 = vector.load %arg1[%c0_13, %c0_14, %c2] : memref<2x3x384xf32, #tpu.memory_space<vmem>>, vector<2x3x256xf32>
    %32 = vector.broadcast %24 : vector<1x1x256xf32> to vector<2x3x256xf32>
    %33 = arith.mulf %31, %32 : vector<2x3x256xf32>
    %c0_15 = arith.constant 0 : index
    %c6 = arith.constant 6 : index
    %c0_16 = arith.constant 0 : index
    %34 = vector.load %arg7[%c0_15, %c6, %c0_16] : memref<2x27x256xf32, #tpu.memory_space<vmem>>, vector<2x3x256xf32>
    tpu.vector_store %arg7[%c0_15, %c6, %c0_16], %33 {strides = array<i32>} : memref<2x27x256xf32, #tpu.memory_space<vmem>>, vector<2x3x256xf32>,
    %c0_17 = arith.constant 0 : index
    %c0_18 = arith.constant 0 : index
    %c16 = arith.constant 16 : index
    %35 = vector.load %arg1[%c0_17, %c0_18, %c16] : memref<2x3x384xf32, #tpu.memory_space<vmem>>, vector<2x3x256xf32>
    %36 = vector.broadcast %20 : vector<1x1x256xf32> to vector<2x3x256xf32>
    %37 = arith.mulf %35, %36 : vector<2x3x256xf32>
    %c0_19 = arith.constant 0 : index
    %c9 = arith.constant 9 : index
    %c0_20 = arith.constant 0 : index
    %38 = vector.load %arg7[%c0_19, %c9, %c0_20] : memref<2x27x256xf32, #tpu.memory_space<vmem>>, vector<2x3x256xf32>
    tpu.vector_store %arg7[%c0_19, %c9, %c0_20], %37 {strides = array<i32>} : memref<2x27x256xf32, #tpu.memory_space<vmem>>, vector<2x3x256xf32>,
    %c0_21 = arith.constant 0 : index
    %c0_22 = arith.constant 0 : index
    %c17 = arith.constant 17 : index
    %39 = vector.load %arg1[%c0_21, %c0_22, %c17] : memref<2x3x384xf32, #tpu.memory_space<vmem>>, vector<2x3x256xf32>
    %c0_23 = arith.constant 0 : index
    %c12 = arith.constant 12 : index
    %c0_24 = arith.constant 0 : index
    %40 = vector.load %arg7[%c0_23, %c12, %c0_24] : memref<2x27x256xf32, #tpu.memory_space<vmem>>, vector<2x3x256xf32>
    tpu.vector_store %arg7[%c0_23, %c12, %c0_24], %39 {strides = array<i32>} : memref<2x27x256xf32, #tpu.memory_space<vmem>>, vector<2x3x256xf32>,
    %c0_25 = arith.constant 0 : index
    %c0_26 = arith.constant 0 : index
    %c18 = arith.constant 18 : index
    %41 = vector.load %arg1[%c0_25, %c0_26, %c18] : memref<2x3x384xf32, #tpu.memory_space<vmem>>, vector<2x3x256xf32>
    %42 = vector.broadcast %24 : vector<1x1x256xf32> to vector<2x3x256xf32>
    %43 = arith.mulf %41, %42 : vector<2x3x256xf32>
    %c0_27 = arith.constant 0 : index
    %c15 = arith.constant 15 : index
    %c0_28 = arith.constant 0 : index
    %44 = vector.load %arg7[%c0_27, %c15, %c0_28] : memref<2x27x256xf32, #tpu.memory_space<vmem>>, vector<2x3x256xf32>
    tpu.vector_store %arg7[%c0_27, %c15, %c0_28], %43 {strides = array<i32>} : memref<2x27x256xf32, #tpu.memory_space<vmem>>, vector<2x3x256xf32>,
    %c0_29 = arith.constant 0 : index
    %c0_30 = arith.constant 0 : index
    %c32 = arith.constant 32 : index
    %45 = vector.load %arg1[%c0_29, %c0_30, %c32] : memref<2x3x384xf32, #tpu.memory_space<vmem>>, vector<2x3x256xf32>
    %46 = vector.broadcast %20 : vector<1x1x256xf32> to vector<2x3x256xf32>
    %47 = arith.mulf %45, %46 : vector<2x3x256xf32>
    %c0_31 = arith.constant 0 : index
    %c18_32 = arith.constant 18 : index
    %c0_33 = arith.constant 0 : index
    %48 = vector.load %arg7[%c0_31, %c18_32, %c0_33] : memref<2x27x256xf32, #tpu.memory_space<vmem>>, vector<2x3x256xf32>
    tpu.vector_store %arg7[%c0_31, %c18_32, %c0_33], %47 {strides = array<i32>} : memref<2x27x256xf32, #tpu.memory_space<vmem>>, vector<2x3x256xf32>,
    %c0_34 = arith.constant 0 : index
    %c0_35 = arith.constant 0 : index
    %c33 = arith.constant 33 : index
    %49 = vector.load %arg1[%c0_34, %c0_35, %c33] : memref<2x3x384xf32, #tpu.memory_space<vmem>>, vector<2x3x256xf32>
    %c0_36 = arith.constant 0 : index
    %c21 = arith.constant 21 : index
    %c0_37 = arith.constant 0 : index
    %50 = vector.load %arg7[%c0_36, %c21, %c0_37] : memref<2x27x256xf32, #tpu.memory_space<vmem>>, vector<2x3x256xf32>
    tpu.vector_store %arg7[%c0_36, %c21, %c0_37], %49 {strides = array<i32>} : memref<2x27x256xf32, #tpu.memory_space<vmem>>, vector<2x3x256xf32>,
    %c0_38 = arith.constant 0 : index
    %c0_39 = arith.constant 0 : index
    %c34 = arith.constant 34 : index
    %51 = vector.load %arg1[%c0_38, %c0_39, %c34] : memref<2x3x384xf32, #tpu.memory_space<vmem>>, vector<2x3x256xf32>
    %52 = vector.broadcast %24 : vector<1x1x256xf32> to vector<2x3x256xf32>
    %53 = arith.mulf %51, %52 : vector<2x3x256xf32>
    %c0_40 = arith.constant 0 : index
    %c24 = arith.constant 24 : index
    %c0_41 = arith.constant 0 : index
    %54 = vector.load %arg7[%c0_40, %c24, %c0_41] : memref<2x27x256xf32, #tpu.memory_space<vmem>>, vector<2x3x256xf32>
    tpu.vector_store %arg7[%c0_40, %c24, %c0_41], %53 {strides = array<i32>} : memref<2x27x256xf32, #tpu.memory_space<vmem>>, vector<2x3x256xf32>,
    %c0_42 = arith.constant 0 : index
    %c0_43 = arith.constant 0 : index
    %55 = vector.load %arg2[%c0_42, %c0_43] : memref<16x27xf32, #tpu.memory_space<vmem>>, vector<16x27xf32>
    %56 = vector.shape_cast %55 : vector<16x27xf32> to vector<1x16x27xf32>
    %57 = vector.shape_cast %56 : vector<1x16x27xf32> to vector<1x16x27xf32>
    %58 = vector.broadcast %57 : vector<1x16x27xf32> to vector<2x16x27xf32>
    %c0_44 = arith.constant 0 : index
    %c0_45 = arith.constant 0 : index
    %c0_46 = arith.constant 0 : index
    %59 = vector.load %arg7[%c0_44, %c0_45, %c0_46] : memref<2x27x256xf32, #tpu.memory_space<vmem>>, vector<2x27x256xf32>
    %cst = arith.constant dense<0.000000e+00> : vector<2x16x256xf32>
    %60 = tpu.matmul %58, %59, %cst {dimension_numbers = #tpu.dot_dimension_numbers<[2], [1], [1], [2], [0, 0, 0, 1, 1, 2], [0], [0]>} : vector<2x16x27xf32>, vector<2x27x256xf32>, vector<2x16x256xf32> -> vector<2x16x256xf32>
    %c0_i32_47 = arith.constant 0 : i32
    %61 = arith.cmpi eq, %arg0, %c0_i32_47 : i32
    %62 = arith.extui %61 : i1 to i32
    %c0_i32_48 = arith.constant 0 : i32
    %63 = arith.cmpi ne, %62, %c0_i32_48 : i32
    scf.if %63 {
      %cst_63 = arith.constant 0.000000e+00 : f32
      %80 = vector.broadcast %cst_63 : f32 to vector<16x1xf32>
      %c0_64 = arith.constant 0 : index
      %c0_65 = arith.constant 0 : index
      %81 = vector.load %arg8[%c0_64, %c0_65] : memref<16x1xf32, #tpu.memory_space<vmem>>, vector<16x1xf32>
      tpu.vector_store %arg8[%c0_64, %c0_65], %80 {strides = array<i32>} : memref<16x1xf32, #tpu.memory_space<vmem>>, vector<16x1xf32>,
      %cst_66 = arith.constant 0.000000e+00 : f32
      %82 = vector.broadcast %cst_66 : f32 to vector<16x1xf32>
      %c0_67 = arith.constant 0 : index
      %c0_68 = arith.constant 0 : index
      %83 = vector.load %arg9[%c0_67, %c0_68] : memref<16x1xf32, #tpu.memory_space<vmem>>, vector<16x1xf32>
      tpu.vector_store %arg9[%c0_67, %c0_68], %82 {strides = array<i32>} : memref<16x1xf32, #tpu.memory_space<vmem>>, vector<16x1xf32>,
    } else {
    }
    %c0_49 = arith.constant 0 : index
    %c0_50 = arith.constant 0 : index
    %64 = vector.load %arg8[%c0_49, %c0_50] : memref<16x1xf32, #tpu.memory_space<vmem>>, vector<16x1xf32>
    %cst_51 = arith.constant dense<0.000000e+00> : vector<2x16xf32>
    %65 = vector.multi_reduction <add>, %60, %cst_51 [2] : vector<2x16x256xf32> to vector<2x16xf32>
    %66 = vector.shape_cast %65 : vector<2x16xf32> to vector<2x16x1xf32>
    %cst_52 = arith.constant dense<0.000000e+00> : vector<16x1xf32>
    %67 = vector.multi_reduction <add>, %66, %cst_52 [0] : vector<2x16x1xf32> to vector<16x1xf32>
    %68 = arith.addf %64, %67 : vector<16x1xf32>
    %c0_53 = arith.constant 0 : index
    %c0_54 = arith.constant 0 : index
    %69 = vector.load %arg8[%c0_53, %c0_54] : memref<16x1xf32, #tpu.memory_space<vmem>>, vector<16x1xf32>
    tpu.vector_store %arg8[%c0_53, %c0_54], %68 {strides = array<i32>} : memref<16x1xf32, #tpu.memory_space<vmem>>, vector<16x1xf32>,
    %c0_55 = arith.constant 0 : index
    %c0_56 = arith.constant 0 : index
    %70 = vector.load %arg9[%c0_55, %c0_56] : memref<16x1xf32, #tpu.memory_space<vmem>>, vector<16x1xf32>
    %71 = arith.mulf %60, %60 : vector<2x16x256xf32>
    %cst_57 = arith.constant dense<0.000000e+00> : vector<2x16xf32>
    %72 = vector.multi_reduction <add>, %71, %cst_57 [2] : vector<2x16x256xf32> to vector<2x16xf32>
    %73 = vector.shape_cast %72 : vector<2x16xf32> to vector<2x16x1xf32>
    %cst_58 = arith.constant dense<0.000000e+00> : vector<16x1xf32>
    %74 = vector.multi_reduction <add>, %73, %cst_58 [0] : vector<2x16x1xf32> to vector<16x1xf32>
    %75 = arith.addf %70, %74 : vector<16x1xf32>
    %c0_59 = arith.constant 0 : index
    %c0_60 = arith.constant 0 : index
    %76 = vector.load %arg9[%c0_59, %c0_60] : memref<16x1xf32, #tpu.memory_space<vmem>>, vector<16x1xf32>
    tpu.vector_store %arg9[%c0_59, %c0_60], %75 {strides = array<i32>} : memref<16x1xf32, #tpu.memory_space<vmem>>, vector<16x1xf32>,
    %c0_i32_61 = arith.constant 0 : i32
    %77 = arith.cmpi eq, %arg0, %c0_i32_61 : i32
    %78 = arith.extui %77 : i1 to i32
    %c0_i32_62 = arith.constant 0 : i32
    %79 = arith.cmpi ne, %78, %c0_i32_62 : i32
    scf.if %79 {
      %c0_63 = arith.constant 0 : index
      %c0_64 = arith.constant 0 : index
      %80 = vector.load %arg8[%c0_63, %c0_64] : memref<16x1xf32, #tpu.memory_space<vmem>>, vector<16x1xf32>
      %cst_65 = arith.constant 0.001953125 : f32
      %81 = vector.broadcast %cst_65 : f32 to vector<16x1xf32>
      %82 = arith.mulf %80, %81 : vector<16x1xf32>
      %c0_66 = arith.constant 0 : index
      %c0_67 = arith.constant 0 : index
      %83 = vector.load %arg9[%c0_66, %c0_67] : memref<16x1xf32, #tpu.memory_space<vmem>>, vector<16x1xf32>
      %cst_68 = arith.constant 0.001953125 : f32
      %84 = vector.broadcast %cst_68 : f32 to vector<16x1xf32>
      %85 = arith.mulf %83, %84 : vector<16x1xf32>
      %86 = arith.mulf %82, %82 : vector<16x1xf32>
      %87 = arith.subf %85, %86 : vector<16x1xf32>
      %cst_69 = arith.constant 0.000000e+00 : f32
      %88 = vector.broadcast %cst_69 : f32 to vector<16x1xf32>
      %89 = arith.maximumf %87, %88 : vector<16x1xf32>
      %cst_70 = arith.constant 9.99999974E-6 : f32
      %90 = vector.broadcast %cst_70 : f32 to vector<16x1xf32>
      %91 = arith.addf %89, %90 : vector<16x1xf32>
      %92 = math.rsqrt %91 : vector<16x1xf32>
      %c0_71 = arith.constant 0 : index
      %c0_72 = arith.constant 0 : index
      %93 = vector.load %arg3[%c0_71, %c0_72] : memref<16x1xf32, #tpu.memory_space<vmem>>, vector<16x1xf32>
      %94 = arith.mulf %93, %92 : vector<16x1xf32>
      %c0_73 = arith.constant 0 : index
      %c0_74 = arith.constant 0 : index
      %95 = vector.load %arg5[%c0_73, %c0_74] : memref<16x1xf32, #tpu.memory_space<vmem>>, vector<16x1xf32>
      tpu.vector_store %arg5[%c0_73, %c0_74], %94 {strides = array<i32>} : memref<16x1xf32, #tpu.memory_space<vmem>>, vector<16x1xf32>,
      %c0_75 = arith.constant 0 : index
      %c0_76 = arith.constant 0 : index
      %96 = vector.load %arg4[%c0_75, %c0_76] : memref<16x1xf32, #tpu.memory_space<vmem>>, vector<16x1xf32>
      %97 = arith.mulf %82, %94 : vector<16x1xf32>
      %98 = arith.subf %96, %97 : vector<16x1xf32>
      %c0_77 = arith.constant 0 : index
      %c0_78 = arith.constant 0 : index
      %99 = vector.load %arg6[%c0_77, %c0_78] : memref<16x1xf32, #tpu.memory_space<vmem>>, vector<16x1xf32>
      tpu.vector_store %arg6[%c0_77, %c0_78], %98 {strides = array<i32>} : memref<16x1xf32, #tpu.memory_space<vmem>>, vector<16x1xf32>,
    } else {
    }
    return
  }
  func.func @transform_0(%arg0: i32) -> (i32, i32, i32) {
    %c0_i32 = arith.constant 0 : i32
    %c0_i32_0 = arith.constant 0 : i32
    %c0_i32_1 = arith.constant 0 : i32
    return %arg0, %c0_i32, %c0_i32_0 : i32, i32, i32
  }
  func.func @transform_1(%arg0: i32) -> (i32, i32) {
    %c0_i32 = arith.constant 0 : i32
    %c0_i32_0 = arith.constant 0 : i32
    %c0_i32_1 = arith.constant 0 : i32
    return %c0_i32, %c0_i32_0 : i32, i32
  }
  func.func @transform_2(%arg0: i32) -> (i32, i32) {
    %c0_i32 = arith.constant 0 : i32
    %c0_i32_0 = arith.constant 0 : i32
    %c0_i32_1 = arith.constant 0 : i32
    return %c0_i32, %c0_i32_0 : i32, i32
  }
  func.func @transform_3(%arg0: i32) -> (i32, i32) {
    %c0_i32 = arith.constant 0 : i32
    %c0_i32_0 = arith.constant 0 : i32
    %c0_i32_1 = arith.constant 0 : i32
    return %c0_i32, %c0_i32_0 : i32, i32
  }
  func.func @transform_4(%arg0: i32) -> (i32, i32) {
    %c0_i32 = arith.constant 0 : i32
    %c0_i32_0 = arith.constant 0 : i32
    %c0_i32_1 = arith.constant 0 : i32
    return %c0_i32, %c0_i32_0 : i32, i32
  }
  func.func @transform_5(%arg0: i32) -> (i32, i32) {
    %c0_i32 = arith.constant 0 : i32
    %c0_i32_0 = arith.constant 0 : i32
    %c0_i32_1 = arith.constant 0 : i32
    return %c0_i32, %c0_i32_0 : i32, i32
  }
}

</mosaic_0001>

<llo_original>
// kernel: tpu_custom_call.1
$region0: #{tpu_custom_call.1}
  #allocation0 [shape = 'u32[]', space=smem, size = 0x4, offset = 0x4, fixed_abs, tag = 'smem constant byte address 0x4 - core index']
  #allocation1 [shape = 'u32[144,128]{1,0:T(1,128)}', space=vmem, size = 0x12000, scoped, tag = 'internal scratch']
  #allocation2 [shape = 'f32[2,27,256]{2,1,0:T(8,128)}', space=vmem, size = 0x10000, scoped, tag = 'scratch operand']
  #allocation3 [shape = 'f32[16,1]{1,0:T(8,128)}', space=vmem, size = 0x2000, scoped, tag = 'scratch operand']
  #allocation4 [shape = 'f32[16,1]{1,0:T(8,128)}', space=vmem, size = 0x2000, scoped, tag = 'scratch operand']
  %s0 = inlined_call_operand.vmem [shape: f32[2,3,384], index: 0, kind: input, shape index: {}]
  %s1 = inlined_call_operand.vmem [shape: f32[16,27], index: 1, kind: input, shape index: {}]
  %s2 = inlined_call_operand.vmem [shape: f32[16,1], index: 2, kind: input, shape index: {}]
  %s3 = inlined_call_operand.vmem [shape: f32[16,1], index: 3, kind: input, shape index: {}]
  %s4 = inlined_call_operand.vmem [shape: f32[16,1], index: 4, kind: output, shape index: {0}]
  %s5 = inlined_call_operand.vmem [shape: f32[16,1], index: 5, kind: output, shape index: {1}]
  %6 = xla_tuple %s4, %s5
  %s7 = sld [smem:[#allocation0]]
  $region42: #{tpu_custom_call.1} parent=0
    _
  %s9 = ssub.s32 1, %s7
  %s10 = scalar_select 0, %s9, %s7
  // Predicated region
  $region2: #{tpu_custom_call.1} parent=0 // pred_check
    _
  $region3: #{tpu_custom_call.1} parent=0 // pred_check_branch
    %12 = sbr.rel (0) target = $region5
  $region4: #{tpu_custom_call.1} parent=0 // pred_region
    _
  $region5: #{tpu_custom_call.1} parent=0 // pred_fallthru
    _
  // Predicated region
  $region6: #{tpu_custom_call.1} parent=0 // pred_check
    _
  $region7: #{tpu_custom_call.1} parent=0 // pred_check_branch
    %14 = sbr.rel (0) target = $region9
  $region8: #{tpu_custom_call.1} parent=0 // pred_region
    _
  $region9: #{tpu_custom_call.1} parent=0 // pred_fallthru
    _
  // Predicated region
  $region10: #{tpu_custom_call.1} parent=0 // pred_check
    _
  $region11: #{tpu_custom_call.1} parent=0 // pred_check_branch
    %16 = sbr.rel (0) target = $region13
  $region12: #{tpu_custom_call.1} parent=0 // pred_region
    _
  $region13: #{tpu_custom_call.1} parent=0 // pred_fallthru
    _
  // Predicated region
  $region14: #{tpu_custom_call.1} parent=0 // pred_check
    _
  $region15: #{tpu_custom_call.1} parent=0 // pred_check_branch
    %18 = sbr.rel (0) target = $region17
  $region16: #{tpu_custom_call.1} parent=0 // pred_region
    _
  $region17: #{tpu_custom_call.1} parent=0 // pred_fallthru
    _
  %v19 = vlaneseq
  %v20 = vand.u32 %v19, 127
  %v21 = vadd.s32 %v20, 128
  %vm22 = vcmp.lt.s32.totalorder %v20, 0
  %v23 = vsub.s32 0, %v20
  %v24 = vsel %vm22, %v23, %v20
  %v25 = vshrl.u32 %v24, 4
  %v26 = vand.u32 %v24, 15
  %v27 = vsub.s32 0, %v26
  %v28 = vsel %vm22, %v27, %v26
  %vm29 = vcmp.lt.s32.totalorder %v21, 0
  %v30 = vsub.s32 0, %v21
  %v31 = vsel %vm29, %v30, %v21
  %v32 = vshrl.u32 %v31, 4
  %v33 = vand.u32 %v31, 15
  %v34 = vsub.s32 0, %v33
  %v35 = vsel %vm29, %v34, %v33
  %vm36 = vcmp.ne.s32.totalorder %v28, 0
  %vm37 = vcmp.ne.s32.totalorder %v35, 0
  %vm38 = vcmp.lt.s32.totalorder %v28, 0
  %vm39 = vcmp.lt.s32.totalorder %v35, 0
  %vm40 = vmand %vm38, %vm36
  %vm41 = vmand %vm39, %vm37
  %v42 = vadd.s32 %v28, 16
  %v43 = vadd.s32 %v35, 16
  %v44 = vsel %vm40, %v42, %v28
  %v45 = vsel %vm41, %v43, %v35
  %vm46 = vcmp.ne.s32.totalorder %v44, 0
  %vm47 = vcmp.ne.s32.totalorder %v45, 0
  %v48 = vsel %vm46, 1, 0
  %v49 = vsel %vm47, 1, 0
  %v50 = vcvt.s32.f32 %v48
  %v51 = vcvt.s32.f32 %v49
  %vm52 = vcmp.ne.s32.totalorder %v44, 15
  %vm53 = vcmp.ne.s32.totalorder %v45, 15
  %v54 = vsel %vm52, 1, 0
  %v55 = vsel %vm53, 1, 0
  %v56 = vcvt.s32.f32 %v54
  %v57 = vcvt.s32.f32 %v55
  %v58 = vld [vmem:[%s0] sm:$0x77]
  %v59 = vld [vmem:[%s0 + $0xc] sm:$0x77]
  %v62 = vcombine.low %v50, %v51
  %v64 = vmul.f32 %v58, %v62
  %v65 = vmul.f32 %v59, %v62
  %v68 = vcombine.high %v64, %v64
  %v69 = vcombine.high %v65, %v65
  %72 = vst [vmem:[#allocation2] sm:$0x7] %v64
  %73 = vst [vmem:[#allocation2 + $0x8] sm:$0x7] %v68
  %74 = vst [vmem:[#allocation2 + $0x40] sm:$0x7] %v65
  %75 = vst [vmem:[#allocation2 + $0x48] sm:$0x7] %v69
  %v76 = vld [vmem:[%s0] sm:$0x77]
  %v77 = vld [vmem:[%s0 + $0x8] sm:$0x7]
  %v78 = vld [vmem:[%s0 + $0xc] sm:$0x77]
  %v79 = vld [vmem:[%s0 + $0x14] sm:$0x7]
  %v84 = vcombine.high %v76, %v76
  %v85 = vcombine.high %v78, %v78
  %v86 = vrot.slane %v76, 5
  %v87 = vrot.slane %v84, 5
  %v88 = vrot.slane %v77, 5
  %v89 = vrot.slane %v78, 5
  %v90 = vrot.slane %v85, 5
  %v91 = vrot.slane %v79, 5
  %92 = vrot.lane.b32.xlu0 %v86, 127
  %v93 = vpop.permute.xlu0 %92
  %94 = vrot.lane.b32.xlu0 %v87, 127
  %v95 = vpop.permute.xlu0 %94
  %96 = vrot.lane.b32.xlu0 %v88, 127
  %v97 = vpop.permute.xlu0 %96
  %98 = vrot.lane.b32.xlu0 %v89, 127
  %v99 = vpop.permute.xlu0 %98
  %100 = vrot.lane.b32.xlu0 %v90, 127
  %v101 = vpop.permute.xlu0 %100
  %102 = vrot.lane.b32.xlu0 %v91, 127
  %v103 = vpop.permute.xlu0 %102
  %vm104 = vcmask 1039360
  %v105 = vsel %vm104, %v93, %v95
  %v106 = vsel %vm104, %v95, %v97
  %v107 = vsel %vm104, %v99, %v101
  %v108 = vsel %vm104, %v101, %v103
  %113 = vst [vmem:[#allocation2] sm:$0x38] %v105
  %114 = vst [vmem:[#allocation2 + $0x8] sm:$0x38] %v106
  %115 = vst [vmem:[#allocation2 + $0x40] sm:$0x38] %v107
  %116 = vst [vmem:[#allocation2 + $0x48] sm:$0x38] %v108
  %v117 = vld [vmem:[%s0] sm:$0x77]
  %v118 = vld [vmem:[%s0 + $0x8] sm:$0x7]
  %v119 = vld [vmem:[%s0 + $0xc] sm:$0x77]
  %v120 = vld [vmem:[%s0 + $0x14] sm:$0x7]
  %v123 = vcombine.low %v56, %v57
  %124 = vrot.lane.b32.xlu0 %v123, 2
  %v125 = vpop.permute.xlu0 %124
  %v126 = vrot.slane %v125, 4
  %vm127 = vcmask 15360
  %v128 = vsel %vm127, %v126, %v125
  %v131 = vmul.f32 %v117, %v128
  %v132 = vmul.f32 %v118, %v126
  %v133 = vmul.f32 %v119, %v128
  %v134 = vmul.f32 %v120, %v126
  %v139 = vcombine.high %v131, %v131
  %v140 = vcombine.high %v133, %v133
  %v141 = vrot.slane %v131, 2
  %v142 = vrot.slane %v139, 2
  %v143 = vrot.slane %v132, 2
  %v144 = vrot.slane %v133, 2
  %v145 = vrot.slane %v140, 2
  %v146 = vrot.slane %v134, 2
  %147 = vrot.lane.b32.xlu0 %v141, 126
  %v148 = vpop.permute.xlu0 %147
  %149 = vrot.lane.b32.xlu0 %v142, 126
  %v150 = vpop.permute.xlu0 %149
  %151 = vrot.lane.b32.xlu0 %v143, 126
  %v152 = vpop.permute.xlu0 %151
  %153 = vrot.lane.b32.xlu0 %v144, 126
  %v154 = vpop.permute.xlu0 %153
  %155 = vrot.lane.b32.xlu0 %v145, 126
  %v156 = vpop.permute.xlu0 %155
  %157 = vrot.lane.b32.xlu0 %v146, 126
  %v158 = vpop.permute.xlu0 %157
  %vm159 = vcmask 1031168
  %v160 = vsel %vm159, %v148, %v150
  %v161 = vsel %vm159, %v150, %v152
  %v162 = vsel %vm159, %v154, %v156
  %v163 = vsel %vm159, %v156, %v158
  %168 = vst [vmem:[#allocation2] sm:$0xc0] %v160
  %169 = vst [vmem:[#allocation2 + $0x8] sm:$0xc0] %v161
  %170 = vst [vmem:[#allocation2 + $0x10] sm:$0x1] %v160
  %171 = vst [vmem:[#allocation2 + $0x18] sm:$0x1] %v161
  %172 = vst [vmem:[#allocation2 + $0x40] sm:$0xc0] %v162
  %173 = vst [vmem:[#allocation2 + $0x48] sm:$0xc0] %v163
  %174 = vst [vmem:[#allocation2 + $0x50] sm:$0x1] %v162
  %175 = vst [vmem:[#allocation2 + $0x58] sm:$0x1] %v163
  %v176 = vld [vmem:[%s0] sm:$0x77]
  %v177 = vld [vmem:[%s0 + $0x8] sm:$0x7]
  %v178 = vld [vmem:[%s0 + $0xc] sm:$0x77]
  %v179 = vld [vmem:[%s0 + $0x14] sm:$0x7]
  %180 = vrot.lane.b32.xlu0 %v62, 16
  %v181 = vpop.permute.xlu0 %180
  %v182 = vrot.slane %v181, 4
  %vm183 = vcmask 130048
  %v184 = vsel %vm183, %v182, %v181
  %v187 = vmul.f32 %v176, %v184
  %v188 = vmul.f32 %v177, %v182
  %v189 = vmul.f32 %v178, %v184
  %v190 = vmul.f32 %v179, %v182
  %v195 = vcombine.high %v187, %v187
  %v196 = vcombine.high %v189, %v189
  %v197 = vrot.slane %v187, 7
  %v198 = vrot.slane %v195, 7
  %v199 = vrot.slane %v188, 7
  %v200 = vrot.slane %v189, 7
  %v201 = vrot.slane %v196, 7
  %v202 = vrot.slane %v190, 7
  %203 = vrot.lane.b32.xlu0 %v197, 112
  %v204 = vpop.permute.xlu0 %203
  %205 = vrot.lane.b32.xlu0 %v198, 112
  %v206 = vpop.permute.xlu0 %205
  %207 = vrot.lane.b32.xlu0 %v199, 112
  %v208 = vpop.permute.xlu0 %207
  %209 = vrot.lane.b32.xlu0 %v200, 112
  %v210 = vpop.permute.xlu0 %209
  %211 = vrot.lane.b32.xlu0 %v201, 112
  %v212 = vpop.permute.xlu0 %211
  %213 = vrot.lane.b32.xlu0 %v202, 112
  %v214 = vpop.permute.xlu0 %213
  %vm215 = vcmask 916480
  %v216 = vsel %vm215, %v204, %v206
  %v217 = vsel %vm215, %v206, %v208
  %v218 = vsel %vm215, %v210, %v212
  %v219 = vsel %vm215, %v212, %v214
  %224 = vst [vmem:[#allocation2 + $0x10] sm:$0xe] %v216
  %225 = vst [vmem:[#allocation2 + $0x18] sm:$0xe] %v217
  %226 = vst [vmem:[#allocation2 + $0x50] sm:$0xe] %v218
  %227 = vst [vmem:[#allocation2 + $0x58] sm:$0xe] %v219
  %v228 = vld [vmem:[%s0] sm:$0x77]
  %v229 = vld [vmem:[%s0 + $0x8] sm:$0x7]
  %v230 = vld [vmem:[%s0 + $0xc] sm:$0x77]
  %v231 = vld [vmem:[%s0 + $0x14] sm:$0x7]
  %v236 = vcombine.low %v228, %v228
  %v237 = vcombine.low %v229, %v229
  %v238 = vcombine.low %v230, %v230
  %v239 = vcombine.low %v231, %v231
  %240 = vrot.lane.b32.xlu0 %v236, 111
  %v241 = vpop.permute.xlu0 %240
  %242 = vrot.lane.b32.xlu0 %v228, 111
  %v243 = vpop.permute.xlu0 %242
  %244 = vrot.lane.b32.xlu0 %v237, 111
  %v245 = vpop.permute.xlu0 %244
  %246 = vrot.lane.b32.xlu0 %v238, 111
  %v247 = vpop.permute.xlu0 %246
  %248 = vrot.lane.b32.xlu0 %v230, 111
  %v249 = vpop.permute.xlu0 %248
  %250 = vrot.lane.b32.xlu0 %v239, 111
  %v251 = vpop.permute.xlu0 %250
  %vm252 = vcmask 908288
  %v253 = vsel %vm252, %v241, %v243
  %v254 = vsel %vm252, %v243, %v245
  %v255 = vsel %vm252, %v247, %v249
  %v256 = vsel %vm252, %v249, %v251
  %261 = vst [vmem:[#allocation2 + $0x10] sm:$0x70] %v253
  %262 = vst [vmem:[#allocation2 + $0x18] sm:$0x70] %v254
  %263 = vst [vmem:[#allocation2 + $0x50] sm:$0x70] %v255
  %264 = vst [vmem:[#allocation2 + $0x58] sm:$0x70] %v256
  %v265 = vld [vmem:[%s0] sm:$0x77]
  %v266 = vld [vmem:[%s0 + $0x8] sm:$0x7]
  %v267 = vld [vmem:[%s0 + $0xc] sm:$0x77]
  %v268 = vld [vmem:[%s0 + $0x14] sm:$0x7]
  %269 = vrot.lane.b32.xlu0 %v123, 18
  %v270 = vpop.permute.xlu0 %269
  %v271 = vrot.slane %v270, 4
  %vm272 = vcmask 146432
  %v273 = vsel %vm272, %v271, %v270
  %v276 = vmul.f32 %v265, %v273
  %v277 = vmul.f32 %v266, %v271
  %v278 = vmul.f32 %v267, %v273
  %v279 = vmul.f32 %v268, %v271
  %v284 = vcombine.high %v276, %v276
  %v285 = vcombine.high %v278, %v278
  %v286 = vrot.slane %v276, 1
  %v287 = vrot.slane %v284, 1
  %v288 = vrot.slane %v277, 1
  %v289 = vrot.slane %v278, 1
  %v290 = vrot.slane %v285, 1
  %v291 = vrot.slane %v279, 1
  %292 = vrot.lane.b32.xlu0 %v286, 110
  %v293 = vpop.permute.xlu0 %292
  %294 = vrot.lane.b32.xlu0 %v287, 110
  %v295 = vpop.permute.xlu0 %294
  %296 = vrot.lane.b32.xlu0 %v288, 110
  %v297 = vpop.permute.xlu0 %296
  %298 = vrot.lane.b32.xlu0 %v289, 110
  %v299 = vpop.permute.xlu0 %298
  %300 = vrot.lane.b32.xlu0 %v290, 110
  %v301 = vpop.permute.xlu0 %300
  %302 = vrot.lane.b32.xlu0 %v291, 110
  %v303 = vpop.permute.xlu0 %302
  %vm304 = vcmask 900096
  %v305 = vsel %vm304, %v293, %v295
  %v306 = vsel %vm304, %v295, %v297
  %v307 = vsel %vm304, %v299, %v301
  %v308 = vsel %vm304, %v301, %v303
  %313 = vst [vmem:[#allocation2 + $0x10] sm:$0x80] %v305
  %314 = vst [vmem:[#allocation2 + $0x18] sm:$0x80] %v306
  %315 = vst [vmem:[#allocation2 + $0x20] sm:$0x3] %v305
  %316 = vst [vmem:[#allocation2 + $0x28] sm:$0x3] %v306
  %317 = vst [vmem:[#allocation2 + $0x50] sm:$0x80] %v307
  %318 = vst [vmem:[#allocation2 + $0x58] sm:$0x80] %v308
  %319 = vst [vmem:[#allocation2 + $0x60] sm:$0x3] %v307
  %320 = vst [vmem:[#allocation2 + $0x68] sm:$0x3] %v308
  %v321 = vld [vmem:[%s0] sm:$0x77]
  %v322 = vld [vmem:[%s0 + $0x8] sm:$0x7]
  %v323 = vld [vmem:[%s0 + $0xc] sm:$0x77]
  %v324 = vld [vmem:[%s0 + $0x14] sm:$0x7]
  %325 = vrot.lane.b32.xlu0 %v62, 32
  %v326 = vpop.permute.xlu0 %325
  %v327 = vrot.slane %v326, 4
  %vm328 = vcmask 261120
  %v329 = vsel %vm328, %v327, %v326
  %v332 = vmul.f32 %v321, %v329
  %v333 = vmul.f32 %v322, %v327
  %v334 = vmul.f32 %v323, %v329
  %v335 = vmul.f32 %v324, %v327
  %v340 = vcombine.high %v332, %v332
  %v341 = vcombine.high %v334, %v334
  %v342 = vrot.slane %v332, 6
  %v343 = vrot.slane %v340, 6
  %v344 = vrot.slane %v333, 6
  %v345 = vrot.slane %v334, 6
  %v346 = vrot.slane %v341, 6
  %v347 = vrot.slane %v335, 6
  %348 = vrot.lane.b32.xlu0 %v342, 96
  %v349 = vpop.permute.xlu0 %348
  %350 = vrot.lane.b32.xlu0 %v343, 96
  %v351 = vpop.permute.xlu0 %350
  %352 = vrot.lane.b32.xlu0 %v344, 96
  %v353 = vpop.permute.xlu0 %352
  %354 = vrot.lane.b32.xlu0 %v345, 96
  %v355 = vpop.permute.xlu0 %354
  %356 = vrot.lane.b32.xlu0 %v346, 96
  %v357 = vpop.permute.xlu0 %356
  %358 = vrot.lane.b32.xlu0 %v347, 96
  %v359 = vpop.permute.xlu0 %358
  %vm360 = vcmask 785408
  %v361 = vsel %vm360, %v349, %v351
  %v362 = vsel %vm360, %v351, %v353
  %v363 = vsel %vm360, %v355, %v357
  %v364 = vsel %vm360, %v357, %v359
  %369 = vst [vmem:[#allocation2 + $0x20] sm:$0x1c] %v361
  %370 = vst [vmem:[#allocation2 + $0x28] sm:$0x1c] %v362
  %371 = vst [vmem:[#allocation2 + $0x60] sm:$0x1c] %v363
  %372 = vst [vmem:[#allocation2 + $0x68] sm:$0x1c] %v364
  %v373 = vld [vmem:[%s0] sm:$0x77]
  %v374 = vld [vmem:[%s0 + $0x8] sm:$0x7]
  %v375 = vld [vmem:[%s0 + $0xc] sm:$0x77]
  %v376 = vld [vmem:[%s0 + $0x14] sm:$0x7]
  %v381 = vcombine.high %v373, %v373
  %v382 = vcombine.high %v375, %v375
  %v383 = vrot.slane %v373, 3
  %v384 = vrot.slane %v381, 3
  %v385 = vrot.slane %v374, 3
  %v386 = vrot.slane %v375, 3
  %v387 = vrot.slane %v382, 3
  %v388 = vrot.slane %v376, 3
  %389 = vrot.lane.b32.xlu0 %v383, 95
  %v390 = vpop.permute.xlu0 %389
  %391 = vrot.lane.b32.xlu0 %v384, 95
  %v392 = vpop.permute.xlu0 %391
  %393 = vrot.lane.b32.xlu0 %v385, 95
  %v394 = vpop.permute.xlu0 %393
  %395 = vrot.lane.b32.xlu0 %v386, 95
  %v396 = vpop.permute.xlu0 %395
  %397 = vrot.lane.b32.xlu0 %v387, 95
  %v398 = vpop.permute.xlu0 %397
  %399 = vrot.lane.b32.xlu0 %v388, 95
  %v400 = vpop.permute.xlu0 %399
  %vm401 = vcmask 777216
  %v402 = vsel %vm401, %v390, %v392
  %v403 = vsel %vm401, %v392, %v394
  %v404 = vsel %vm401, %v396, %v398
  %v405 = vsel %vm401, %v398, %v400
  %410 = vst [vmem:[#allocation2 + $0x20] sm:$0xe0] %v402
  %411 = vst [vmem:[#allocation2 + $0x28] sm:$0xe0] %v403
  %412 = vst [vmem:[#allocation2 + $0x60] sm:$0xe0] %v404
  %413 = vst [vmem:[#allocation2 + $0x68] sm:$0xe0] %v405
  %v414 = vld [vmem:[%s0] sm:$0x77]
  %v415 = vld [vmem:[%s0 + $0x8] sm:$0x7]
  %v416 = vld [vmem:[%s0 + $0xc] sm:$0x77]
  %v417 = vld [vmem:[%s0 + $0x14] sm:$0x7]
  %418 = vrot.lane.b32.xlu0 %v123, 34
  %v419 = vpop.permute.xlu0 %418
  %v420 = vrot.slane %v419, 4
  %vm421 = vcmask 277504
  %v422 = vsel %vm421, %v420, %v419
  %v425 = vmul.f32 %v414, %v422
  %v426 = vmul.f32 %v415, %v420
  %v427 = vmul.f32 %v416, %v422
  %v428 = vmul.f32 %v417, %v420
  %v433 = vcombine.high %v425, %v425
  %v434 = vcombine.high %v427, %v427
  %435 = vrot.lane.b32.xlu0 %v425, 94
  %v436 = vpop.permute.xlu0 %435
  %437 = vrot.lane.b32.xlu0 %v433, 94
  %v438 = vpop.permute.xlu0 %437
  %439 = vrot.lane.b32.xlu0 %v426, 94
  %v440 = vpop.permute.xlu0 %439
  %441 = vrot.lane.b32.xlu0 %v427, 94
  %v442 = vpop.permute.xlu0 %441
  %443 = vrot.lane.b32.xlu0 %v434, 94
  %v444 = vpop.permute.xlu0 %443
  %445 = vrot.lane.b32.xlu0 %v428, 94
  %v446 = vpop.permute.xlu0 %445
  %vm447 = vcmask 769024
  %v448 = vsel %vm447, %v436, %v438
  %v449 = vsel %vm447, %v438, %v440
  %v450 = vsel %vm447, %v442, %v444
  %v451 = vsel %vm447, %v444, %v446
  %456 = vst [vmem:[#allocation2 + $0x30] sm:$0x7] %v448
  %457 = vst [vmem:[#allocation2 + $0x38] sm:$0x7] %v449
  %458 = vst [vmem:[#allocation2 + $0x70] sm:$0x7] %v450
  %459 = vst [vmem:[#allocation2 + $0x78] sm:$0x7] %v451
  %v460 = vld [vmem:[%s1] sm:$0xff]
  %v461 = vld [vmem:[%s1 + $0x8] sm:$0xff]
  %v462 = vld [vmem:[#allocation2] sm:$0xff]
  %v463 = vld [vmem:[#allocation2 + $0x8] sm:$0xff]
  %v464 = vld [vmem:[#allocation2 + $0x10] sm:$0xff]
  %v465 = vld [vmem:[#allocation2 + $0x18] sm:$0xff]
  %v466 = vld [vmem:[#allocation2 + $0x20] sm:$0xff]
  %v467 = vld [vmem:[#allocation2 + $0x28] sm:$0xff]
  %v468 = vld [vmem:[#allocation2 + $0x30] sm:$0x7]
  %v469 = vld [vmem:[#allocation2 + $0x38] sm:$0x7]
  %v470 = vld [vmem:[#allocation2 + $0x40] sm:$0xff]
  %v471 = vld [vmem:[#allocation2 + $0x48] sm:$0xff]
  %v472 = vld [vmem:[#allocation2 + $0x50] sm:$0xff]
  %v473 = vld [vmem:[#allocation2 + $0x58] sm:$0xff]
  %v474 = vld [vmem:[#allocation2 + $0x60] sm:$0xff]
  %v475 = vld [vmem:[#allocation2 + $0x68] sm:$0xff]
  %v476 = vld [vmem:[#allocation2 + $0x70] sm:$0x7]
  %v477 = vld [vmem:[#allocation2 + $0x78] sm:$0x7]
  %vm478 = vcmask 220160
  %v480 = vsel %vm478, %v460, 0
  %v483 = vsel %vm478, %v461, 0
  %vm485 = vcmask 1042432
  %v487 = vsel %vm485, %v468, 0
  %v490 = vsel %vm485, %v469, 0
  %492 = vmatprep.subr.mxu0 0.0
  %493 = vmatpush1.msra.mxu0 0.0
  %494 = vmatprep.subr.mxu0 0.0
  %495 = vmatpush1.msra.mxu0 0.0
  %496 = vmatprep.subr.mxu0 0.0
  %497 = vmatpush1.msra.mxu0 0.0
  %498 = vmatprep.subr.mxu0 0.0
  %499 = vmatpush1.msra.mxu0 0.0
  %500 = vmatprep.subr.mxu0 0.0
  %501 = vmatpush1.msra.mxu0 0.0
  %502 = vmatprep.subr.mxu0 0.0
  %503 = vmatpush1.msra.mxu0 0.0
  %504 = vmatprep.subr.mxu0 0.0
  %505 = vmatpush1.msra.mxu0 0.0
  %506 = vmatprep.subr.mxu0 0.0
  %507 = vmatpush1.msra.mxu0 0.0
  %508 = vmatprep.subr.mxu0 0.0
  %509 = vmatpush1.msra.mxu0 0.0
  %510 = vmatprep.subr.mxu0 0.0
  %511 = vmatpush1.msra.mxu0 0.0
  %512 = vmatprep.subr.mxu0 0.0
  %513 = vmatpush1.msra.mxu0 0.0
  %514 = vmatprep.subr.mxu0 0.0
  %515 = vmatpush1.msra.mxu0 0.0
  %516 = vmatprep.subr.mxu0 %v490
  %517 = vmatpush1.msra.mxu0 %v487
  %518 = vmatprep.subr.mxu0 %v467
  %519 = vmatpush1.msra.mxu0 %v466
  %520 = vmatprep.subr.mxu0 %v465
  %521 = vmatpush1.msra.mxu0 %v464
  %522 = vmatprep.subr.mxu0 %v463
  %523 = vmatpush1.msra.mxu0 %v462
  %524 = vmatprep.subr.mxu0 0.0
  %525 = vmatpush2.msra.mxu0 0.0
  %526 = vmatprep.subr.mxu0 0.0
  %527 = vmatpush2.msra.mxu0 0.0
  %528 = vmatprep.subr.mxu0 0.0
  %529 = vmatpush2.msra.mxu0 0.0
  %530 = vmatprep.subr.mxu0 0.0
  %531 = vmatpush2.msra.mxu0 0.0
  %532 = vmatprep.subr.mxu0 0.0
  %533 = vmatpush2.msra.mxu0 0.0
  %534 = vmatprep.subr.mxu0 0.0
  %535 = vmatpush2.msra.mxu0 0.0
  %536 = vmatprep.subr.mxu0 0.0
  %537 = vmatpush2.msra.mxu0 0.0
  %538 = vmatprep.subr.mxu0 0.0
  %539 = vmatpush2.msra.mxu0 0.0
  %540 = vmatprep.subr.mxu0 0.0
  %541 = vmatpush2.msra.mxu0 0.0
  %542 = vmatprep.subr.mxu0 0.0
  %543 = vmatpush2.msra.mxu0 0.0
  %544 = vmatprep.subr.mxu0 0.0
  %545 = vmatpush2.msra.mxu0 0.0
  %546 = vmatprep.subr.mxu0 0.0
  %547 = vmatpush2.msra.mxu0 0.0
  %548 = vmatprep.subr.mxu0 0.0
  %549 = vmatpush2.msra.mxu0 0.0
  %550 = vmatprep.subr.mxu0 0.0
  %551 = vmatpush2.msra.mxu0 0.0
  %552 = vmatprep.subr.mxu0 0.0
  %553 = vmatpush2.msra.mxu0 0.0
  %554 = vmatprep.subr.mxu0 0.0
  %555 = vmatpush2.msra.mxu0 0.0
  %556 = vmatprep.mubr.f32.mxu0 0.0
  %557 = vmatmul.mubr.f32.gmra.mxu0 %v480
  %v558 = vpop.f32.mrf.mxu0
  %v559 = vadd.f32 0.0, %v558
  %v560 = vpop.f32.mrf.mxu0
  %v561 = vadd.f32 0.0, %v560
  %562 = vmatprep.mubr.f32.mxu0 0.0
  %563 = vmatmul.mubr.f32.gmra.mxu0 %v483
  %v564 = vpop.f32.mrf.mxu0
  %v565 = vadd.f32 0.0, %v564
  %v566 = vpop.f32.mrf.mxu0
  %v567 = vadd.f32 0.0, %v566
  %568 = vdwg.mxu0
  %v570 = vsel %vm485, %v476, 0
  %v573 = vsel %vm485, %v477, 0
  %575 = vmatprep.subr.mxu0 0.0
  %576 = vmatpush1.msra.mxu0 0.0
  %577 = vmatprep.subr.mxu0 0.0
  %578 = vmatpush1.msra.mxu0 0.0
  %579 = vmatprep.subr.mxu0 0.0
  %580 = vmatpush1.msra.mxu0 0.0
  %581 = vmatprep.subr.mxu0 0.0
  %582 = vmatpush1.msra.mxu0 0.0
  %583 = vmatprep.subr.mxu0 0.0
  %584 = vmatpush1.msra.mxu0 0.0
  %585 = vmatprep.subr.mxu0 0.0
  %586 = vmatpush1.msra.mxu0 0.0
  %587 = vmatprep.subr.mxu0 0.0
  %588 = vmatpush1.msra.mxu0 0.0
  %589 = vmatprep.subr.mxu0 0.0
  %590 = vmatpush1.msra.mxu0 0.0
  %591 = vmatprep.subr.mxu0 0.0
  %592 = vmatpush1.msra.mxu0 0.0
  %593 = vmatprep.subr.mxu0 0.0
  %594 = vmatpush1.msra.mxu0 0.0
  %595 = vmatprep.subr.mxu0 0.0
  %596 = vmatpush1.msra.mxu0 0.0
  %597 = vmatprep.subr.mxu0 0.0
  %598 = vmatpush1.msra.mxu0 0.0
  %599 = vmatprep.subr.mxu0 %v573
  %600 = vmatpush1.msra.mxu0 %v570
  %601 = vmatprep.subr.mxu0 %v475
  %602 = vmatpush1.msra.mxu0 %v474
  %603 = vmatprep.subr.mxu0 %v473
  %604 = vmatpush1.msra.mxu0 %v472
  %605 = vmatprep.subr.mxu0 %v471
  %606 = vmatpush1.msra.mxu0 %v470
  %607 = vmatprep.subr.mxu0 0.0
  %608 = vmatpush2.msra.mxu0 0.0
  %609 = vmatprep.subr.mxu0 0.0
  %610 = vmatpush2.msra.mxu0 0.0
  %611 = vmatprep.subr.mxu0 0.0
  %612 = vmatpush2.msra.mxu0 0.0
  %613 = vmatprep.subr.mxu0 0.0
  %614 = vmatpush2.msra.mxu0 0.0
  %615 = vmatprep.subr.mxu0 0.0
  %616 = vmatpush2.msra.mxu0 0.0
  %617 = vmatprep.subr.mxu0 0.0
  %618 = vmatpush2.msra.mxu0 0.0
  %619 = vmatprep.subr.mxu0 0.0
  %620 = vmatpush2.msra.mxu0 0.0
  %621 = vmatprep.subr.mxu0 0.0
  %622 = vmatpush2.msra.mxu0 0.0
  %623 = vmatprep.subr.mxu0 0.0
  %624 = vmatpush2.msra.mxu0 0.0
  %625 = vmatprep.subr.mxu0 0.0
  %626 = vmatpush2.msra.mxu0 0.0
  %627 = vmatprep.subr.mxu0 0.0
  %628 = vmatpush2.msra.mxu0 0.0
  %629 = vmatprep.subr.mxu0 0.0
  %630 = vmatpush2.msra.mxu0 0.0
  %631 = vmatprep.subr.mxu0 0.0
  %632 = vmatpush2.msra.mxu0 0.0
  %633 = vmatprep.subr.mxu0 0.0
  %634 = vmatpush2.msra.mxu0 0.0
  %635 = vmatprep.subr.mxu0 0.0
  %636 = vmatpush2.msra.mxu0 0.0
  %637 = vmatprep.subr.mxu0 0.0
  %638 = vmatpush2.msra.mxu0 0.0
  %639 = vmatprep.mubr.f32.mxu0 0.0
  %640 = vmatmul.mubr.f32.gmra.mxu0 %v480
  %v641 = vpop.f32.mrf.mxu0
  %v642 = vadd.f32 0.0, %v641
  %v643 = vpop.f32.mrf.mxu0
  %v644 = vadd.f32 0.0, %v643
  %645 = vmatprep.mubr.f32.mxu0 0.0
  %646 = vmatmul.mubr.f32.gmra.mxu0 %v483
  %v647 = vpop.f32.mrf.mxu0
  %v648 = vadd.f32 0.0, %v647
  %v649 = vpop.f32.mrf.mxu0
  %v650 = vadd.f32 0.0, %v649
  %651 = vdwg.mxu0
  %p652 = scmp.eq.s32.totalorder 0, 0
  // Predicated region
  $region18: #{tpu_custom_call.1} parent=0 // pred_check
    %p653 = pneg %p652
  $region19: #{tpu_custom_call.1} parent=0 // pred_check_branch
    %655 = sbr.rel (%p653) target = $region21
  $region20: #{tpu_custom_call.1} parent=0 // pred_region
    %vm656 = vcmask 7168
    %657 = vst.msk [vmem:[#allocation3] sm:$0xff] %vm656, 0.0
    %658 = vst.msk [vmem:[#allocation3 + $0x8] sm:$0xff] %vm656, 0.0
    %659 = vst.msk [vmem:[#allocation4] sm:$0xff] %vm656, 0.0
    %660 = vst.msk [vmem:[#allocation4 + $0x8] sm:$0xff] %vm656, 0.0
  $region21: #{tpu_custom_call.1} parent=0 // pred_fallthru
    _
  %v661 = vld [vmem:[#allocation3] sm:$0xff]
  %v662 = vld [vmem:[#allocation3 + $0x8] sm:$0xff]
  %v663 = vadd.f32 %v559, %v561
  %664 = vadd.xlane.f32.xlu0 %v663
  %v665 = vpop.xlane.xlu0 %664
  %v666 = vadd.f32 %v565, %v567
  %667 = vadd.xlane.f32.xlu0 %v666
  %v668 = vpop.xlane.xlu0 %667
  %v669 = vadd.f32 %v642, %v644
  %670 = vadd.xlane.f32.xlu0 %v669
  %v671 = vpop.xlane.xlu0 %670
  %v672 = vadd.f32 %v648, %v650
  %673 = vadd.xlane.f32.xlu0 %v672
  %v674 = vpop.xlane.xlu0 %673
  %v675 = vadd.f32 %v665, %v671
  %v676 = vadd.f32 %v668, %v674
  %v677 = vadd.f32 %v661, %v675
  %v678 = vadd.f32 %v662, %v676
  %vm679 = vcmask 7168
  %680 = vst.msk [vmem:[#allocation3] sm:$0xff] %vm679, %v677
  %681 = vst.msk [vmem:[#allocation3 + $0x8] sm:$0xff] %vm679, %v678
  %v682 = vld [vmem:[#allocation4] sm:$0xff]
  %v683 = vld [vmem:[#allocation4 + $0x8] sm:$0xff]
  %v684 = vmul.f32 %v559, %v559
  %v685 = vmul.f32 %v561, %v561
  %v686 = vmul.f32 %v565, %v565
  %v687 = vmul.f32 %v567, %v567
  %v688 = vmul.f32 %v642, %v642
  %v689 = vmul.f32 %v644, %v644
  %v690 = vmul.f32 %v648, %v648
  %v691 = vmul.f32 %v650, %v650
  %v692 = vadd.f32 %v684, %v685
  %693 = vadd.xlane.f32.xlu0 %v692
  %v694 = vpop.xlane.xlu0 %693
  %v695 = vadd.f32 %v686, %v687
  %696 = vadd.xlane.f32.xlu0 %v695
  %v697 = vpop.xlane.xlu0 %696
  %v698 = vadd.f32 %v688, %v689
  %699 = vadd.xlane.f32.xlu0 %v698
  %v700 = vpop.xlane.xlu0 %699
  %v701 = vadd.f32 %v690, %v691
  %702 = vadd.xlane.f32.xlu0 %v701
  %v703 = vpop.xlane.xlu0 %702
  %v704 = vadd.f32 %v694, %v700
  %v705 = vadd.f32 %v697, %v703
  %v706 = vadd.f32 %v682, %v704
  %v707 = vadd.f32 %v683, %v705
  %708 = vst.msk [vmem:[#allocation4] sm:$0xff] %vm679, %v706
  %709 = vst.msk [vmem:[#allocation4 + $0x8] sm:$0xff] %vm679, %v707
  // Predicated region
  $region22: #{tpu_custom_call.1} parent=0 // pred_check
    %p710 = pneg %p652
  $region23: #{tpu_custom_call.1} parent=0 // pred_check_branch
    %712 = sbr.rel (%p710) target = $region25
  $region24: #{tpu_custom_call.1} parent=0 // pred_region
    %v713 = vld [vmem:[#allocation3] sm:$0xff]
    %v714 = vld [vmem:[#allocation3 + $0x8] sm:$0xff]
    %v715 = vmul.f32 %v713, 0.001953125
    %v716 = vmul.f32 %v714, 0.001953125
    %v717 = vld [vmem:[#allocation4] sm:$0xff]
    %v718 = vld [vmem:[#allocation4 + $0x8] sm:$0xff]
    %v719 = vmul.f32 %v717, 0.001953125
    %v720 = vmul.f32 %v718, 0.001953125
    %v721 = vmul.f32 %v715, %v715
    %v722 = vmul.f32 %v716, %v716
    %v723 = vsub.f32 %v719, %v721
    %v724 = vsub.f32 %v720, %v722
    %v725 = vmax.f32 %v723, 0.0
    %v726 = vmax.f32 %v724, 0.0
    %v727 = vadd.f32 %v725, 1e-05
    %v728 = vadd.f32 %v726, 1e-05
    %v729 = vrsqrt.pop %v727
    %v730 = vrsqrt.pop %v728
    %v731 = vld [vmem:[%s2] sm:$0xff]
    %v732 = vld [vmem:[%s2 + $0x8] sm:$0xff]
    %v733 = vmul.f32 %v731, %v729
    %v734 = vmul.f32 %v732, %v730
    %735 = vst.msk [vmem:[%s4] sm:$0xff] %vm679, %v733
    %736 = vst.msk [vmem:[%s4 + $0x8] sm:$0xff] %vm679, %v734
    %v737 = vld [vmem:[%s3] sm:$0xff]
    %v738 = vld [vmem:[%s3 + $0x8] sm:$0xff]
    %v739 = vmul.f32 %v715, %v733
    %v740 = vmul.f32 %v716, %v734
    %v741 = vsub.f32 %v737, %v739
    %v742 = vsub.f32 %v738, %v740
    %743 = vst.msk [vmem:[%s5] sm:$0xff] %vm679, %v741
    %744 = vst.msk [vmem:[%s5 + $0x8] sm:$0xff] %vm679, %v742
  $region25: #{tpu_custom_call.1} parent=0 // pred_fallthru
    _
  // Predicated region
  $region26: #{tpu_custom_call.1} parent=0 // pred_check
    _
  $region27: #{tpu_custom_call.1} parent=0 // pred_check_branch
    %746 = sbr.rel (0) target = $region29
  $region28: #{tpu_custom_call.1} parent=0 // pred_region
    _
  $region29: #{tpu_custom_call.1} parent=0 // pred_fallthru
    _
  // Predicated region
  $region30: #{tpu_custom_call.1} parent=0 // pred_check
    _
  $region31: #{tpu_custom_call.1} parent=0 // pred_check_branch
    %748 = sbr.rel (0) target = $region33
  $region32: #{tpu_custom_call.1} parent=0 // pred_region
    _
  $region33: #{tpu_custom_call.1} parent=0 // pred_fallthru
    _
  // Predicated region
  $region34: #{tpu_custom_call.1} parent=0 // pred_check
    _
  $region35: #{tpu_custom_call.1} parent=0 // pred_check_branch
    %750 = sbr.rel (0) target = $region37
  $region36: #{tpu_custom_call.1} parent=0 // pred_region
    _
  $region37: #{tpu_custom_call.1} parent=0 // pred_fallthru
    _
  // Predicated region
  $region38: #{tpu_custom_call.1} parent=0 // pred_check
    _
  $region39: #{tpu_custom_call.1} parent=0 // pred_check_branch
    %752 = sbr.rel (0) target = $region41
  $region40: #{tpu_custom_call.1} parent=0 // pred_region
    _
  $region41: #{tpu_custom_call.1} parent=0 // pred_fallthru
    _

</llo_original>
